<compile_context>
chip_gen: v7x
topology: tpu7x:2x2x1
jax: 0.10.0
libtpu: 0.0.40
codegen_flags: <defaults>
</compile_context>

<pallas_src>
import jax
import jax.numpy as jnp
from jax.experimental import pallas as pl
from jax.experimental.pallas import tpu as pltpu


# ---------------------------------------------------------------------------
# Conv 3x3 (stride 1, pad 1, no bias) + fused BatchNorm partial statistics.
# ---------------------------------------------------------------------------
def _conv_stats_kernel(x_ref, w_ref, y_ref, stat_ref):
    # x_ref   : (1, Hp, Wp*Cin)      f32   whole padded image of batch n
    # w_ref   : (KH, Wp*Cin, W*Cout) bf16  banded (block-Toeplitz) weight
    # y_ref   : (1, TH, W*Cout)      f32   lane-dense output row band
    # stat_ref: (1, 1, 2, W*Cout)    f32   per-tile [sum, sum_sq] per column
    _, TH, WC = y_ref.shape
    KH = w_ref.shape[0]

    h = pl.program_id(1)
    row0 = pl.multiple_of(h * TH, TH)        # aligned top row of this band (padded coords)

    # One aligned load of the TH + KH - 1 padded input rows this band touches.
    band = x_ref[0, pl.ds(row0, TH + KH - 1), :]               # (TH+2, Wp*Cin) f32

    # KH fat MXU matmuls (K = Wp*Cin, N = W*Cout), f32 accumulation.
    # kh shifts are cheap static value slices; kw shifts are folded into w_ref.
    acc = jnp.zeros((TH, WC), jnp.float32)
    for kh in range(KH):                                       # unrolled
        xb = band[kh:kh + TH, :].astype(jnp.bfloat16)          # bf16 MXU inputs
        acc = acc + jnp.dot(xb, w_ref[kh],
                            preferred_element_type=jnp.float32)

    # Fused BatchNorm partial statistics: removes one full HBM pass over y.
    stat_ref[0, 0, 0:1, :] = jnp.sum(acc, axis=0, keepdims=True)
    stat_ref[0, 0, 1:2, :] = jnp.sum(acc * acc, axis=0, keepdims=True)

    # Lane-dense (128-wide minor dim) store: unmasked vst, no relayout needed.
    y_ref[0, :, :] = acc


def conv2d_bnstats_pallas(x_nhwc, w, *, th=8):
    """3x3 / stride-1 / pad-1 conv (no bias) with fused per-channel sum/sumsq.

    x_nhwc : (N, H, W, Cin) f32,  w : (KH, KW, Cin, Cout) f32.
    Returns y: (N, H, W*Cout) f32 (NHWC with W folded into lanes) and
            stats: (N, H//th, 2, W*Cout) f32 partial [sum, sum_sq] per tile.
    """
    N, H, W, Cin = x_nhwc.shape
    KH, KW, _, Cout = w.shape
    assert (KH, KW) == (3, 3), "ConvBnAct uses 3x3 kernels"
    assert H % th == 0
    nh = H // th
    ph, pw = KH // 2, KW // 2
    Hp, Wp = H + 2 * ph, W + 2 * pw

    # Halo pad + fold (W, Cin) into one lane axis.
    xp = jnp.pad(x_nhwc, ((0, 0), (ph, ph), (pw, pw), (0, 0)))
    xp = xp.reshape(N, Hp, Wp * Cin)

    # Banded / block-Toeplitz weight:
    #   B[kh, wp*Cin+ci, wo*Cout+co] = w[kh, wp-wo, ci, co] if 0<=wp-wo<KW else 0
    # Folds the kw taps into the weight so the kernel needs no kw shifts and
    # its matmul result is already lane-dense.  (Small-W trick: for realistic
    # BurgerFormer widths, tile Cout in 128/256 chunks with a plain
    # (KH*KW*Cin, Cout) im2col weight instead.)
    sel = (jnp.arange(Wp)[None, :, None] ==
           jnp.arange(W)[None, None, :] + jnp.arange(KW)[:, None, None])
    sel = sel.astype(w.dtype)                                   # (KW, Wp, W)
    wexp = jnp.einsum('kpq,hkio->hpiqo', sel, w,
                      precision=jax.lax.Precision.HIGHEST)
    wexp = wexp.reshape(KH, Wp * Cin, W * Cout).astype(jnp.bfloat16)

    return pl.pallas_call(
        _conv_stats_kernel,
        out_shape=(jax.ShapeDtypeStruct((N, H, W * Cout), jnp.float32),
                   jax.ShapeDtypeStruct((N, nh, 2, W * Cout), jnp.float32)),
        grid_spec=pltpu.PrefetchScalarGridSpec(
            num_scalar_prefetch=0,
            grid=(N, nh),
            in_specs=[
                # Whole padded image of batch n: block index is constant over
                # the h axis, so Pallas skips the redundant re-DMA between
                # consecutive h steps.  (For large images, switch to
                # halo-banded H blocks.)
                pl.BlockSpec((1, Hp, Wp * Cin), lambda n, h: (n, 0, 0)),
                pl.BlockSpec((KH, Wp * Cin, W * Cout), lambda n, h: (0, 0, 0)),
            ],
            out_specs=[
                pl.BlockSpec((1, th, W * Cout), lambda n, h: (n, h, 0)),
                pl.BlockSpec((1, 1, 2, W * Cout), lambda n, h: (n, h, 0, 0)),
            ],
        ),
        compiler_params=pltpu.CompilerParams(
            dimension_semantics=("parallel", "parallel"),
            vmem_limit_bytes=32 * 1024 * 1024,
        ),
    )(xp, wexp)


# ---------------------------------------------------------------------------
# Fused BatchNorm affine + ReLU (elementwise, VPU path, f32 for v5e safety).
# ---------------------------------------------------------------------------
def _bn_relu_kernel(y_ref, scale_ref, shift_ref, o_ref):
    # y_ref/o_ref : (1, TH, W*Cout) f32 lane-dense
    # scale/shift : (1, W*Cout)     f32 per-channel affine tiled over W
    o_ref[...] = jnp.maximum(y_ref[...] * scale_ref[...] + shift_ref[...], 0.0)


def bn_relu_pallas(y, scale_row, shift_row, *, th=None):
    N, H, WC = y.shape
    if th is None:
        # Memory-bound elementwise pass: use the biggest row band that fits
        # comfortably in VMEM (full image here) to minimise per-step overhead.
        th = H
    assert H % th == 0
    return pl.pallas_call(
        _bn_relu_kernel,
        out_shape=jax.ShapeDtypeStruct((N, H, WC), jnp.float32),
        grid_spec=pltpu.PrefetchScalarGridSpec(
            num_scalar_prefetch=0,
            grid=(N, H // th),
            in_specs=[
                pl.BlockSpec((1, th, WC), lambda n, h: (n, h, 0)),
                pl.BlockSpec((1, WC), lambda n, h: (0, 0)),
                pl.BlockSpec((1, WC), lambda n, h: (0, 0)),
            ],
            out_specs=pl.BlockSpec((1, th, WC), lambda n, h: (n, h, 0)),
        ),
        compiler_params=pltpu.CompilerParams(
            dimension_semantics=("parallel", "parallel"),
            vmem_limit_bytes=32 * 1024 * 1024,
        ),
    )(y, scale_row, shift_row)


# ---------------------------------------------------------------------------
# ConvBnAct forward (PyTorch semantics: training-mode batch stats, eps=1e-5).
# ---------------------------------------------------------------------------
def conv_bn_act_forward(x_nchw, w, gamma, beta, eps=1e-5, th=8):
    N, Cin, H, W = x_nchw.shape
    KH, KW, _, Cout = w.shape
    # TODO(synk): only the ConvBnAct building block is implemented (Block/meso
    # stages, GroupNorm, strided PatchEmbed convs of BurgerFormer are not in
    # the provided spec); in a full network the activations would stay in the
    # NHWC/lane-folded layout so these boundary transposes disappear.
    x_nhwc = jnp.transpose(x_nchw, (0, 2, 3, 1)).astype(jnp.float32)

    y, stats = conv2d_bnstats_pallas(x_nhwc, w, th=th)        # y: (N, H, W*Cout)

    # Tiny scalar work: finish the fused BN statistics.
    col_sums = jnp.sum(stats, axis=(0, 1))                    # (2, W*Cout)
    sums = col_sums.reshape(2, W, Cout).sum(axis=1)           # (2, Cout)
    count = N * H * W
    mean = sums[0] / count
    var = sums[1] / count - mean * mean                       # biased var (BN training mode)
    scale = gamma / jnp.sqrt(var + eps)
    shift = beta - mean * scale
    scale_row = jnp.tile(scale, W).reshape(1, W * Cout)       # lane-dense per-(w, c) rows
    shift_row = jnp.tile(shift, W).reshape(1, W * Cout)

    out = bn_relu_pallas(y, scale_row, shift_row)             # (N, H, W*Cout)
    out = out.reshape(N, H, W, Cout)
    return jnp.transpose(out, (0, 3, 1, 2))                   # back to NCHW


if __name__ == "__main__":
    key = jax.random.PRNGKey(0)
    k_x, k_w = jax.random.split(key)

    N, Cin, H, W = 2, 4, 16, 16
    Cout, KH, KW = 8, 3, 3

    x = jax.random.normal(k_x, (N, Cin, H, W), dtype=jnp.float32)
    fan_in = Cin * KH * KW
    w = jax.random.normal(k_w, (KH, KW, Cin, Cout), dtype=jnp.float32) \
        * (2.0 / fan_in) ** 0.5
    gamma = jnp.ones((Cout,), jnp.float32)
    beta = jnp.zeros((Cout,), jnp.float32)

    out = conv_bn_act_forward(x, w, gamma, beta)
    out = jax.block_until_ready(out)

    # Pure-JAX f32 reference (tolerance relaxed because the kernel feeds the
    # MXU bf16 inputs with f32 accumulation).
    y_ref = jax.lax.conv_general_dilated(
        x, jnp.transpose(w, (3, 2, 0, 1)),        # OIHW
        window_strides=(1, 1), padding=((1, 1), (1, 1)),
        dimension_numbers=("NCHW", "OIHW", "NCHW"))
    mean_r = jnp.mean(y_ref, axis=(0, 2, 3), keepdims=True)
    var_r = jnp.mean(jnp.square(y_ref - mean_r), axis=(0, 2, 3), keepdims=True)
    ref = gamma.reshape(1, -1, 1, 1) * (y_ref - mean_r) / jnp.sqrt(var_r + 1e-5) \
        + beta.reshape(1, -1, 1, 1)
    ref = jnp.maximum(ref, 0.0)

    assert out.shape == (N, Cout, H, W)
    assert jnp.allclose(out, ref, atol=3e-2, rtol=3e-2), \
        float(jnp.max(jnp.abs(out - ref)))

    print("KERNEL_OK")
</pallas_src>

<mosaic_0001>
module attributes {stable_mosaic.version = 11 : i64} {
  func.func @_conv_stats_kernel(%arg0: i32, %arg1: i32, %arg2: memref<1x18x72xf32, #tpu.memory_space<vmem>>, %arg3: memref<3x72x128xbf16, #tpu.memory_space<vmem>>, %arg4: memref<1x8x128xf32, #tpu.memory_space<vmem>>, %arg5: memref<1x1x2x128xf32, #tpu.memory_space<vmem>>) attributes {dimension_semantics = [#tpu.dimension_semantics<parallel>, #tpu.dimension_semantics<parallel>], iteration_bounds = array<i64: 2, 2>, scalar_prefetch = 0 : i64, scratch_operands = 0 : i64, tpu.core_type = #tpu.core_type<tc>, window_params = [{transform_indices = @transform_0, window_bounds = array<i64: 1, 18, 72>}, {pipeline_mode = #tpu.pipeline_mode<synchronous>, transform_indices = @transform_1, window_bounds = array<i64: 3, 72, 128>}, {transform_indices = @transform_2, window_bounds = array<i64: 1, 8, 128>}, {transform_indices = @transform_3, window_bounds = array<i64: 1, 1, 2, 128>}]} {
    %c8_i32 = arith.constant 8 : i32
    %0 = arith.muli %arg1, %c8_i32 : i32
    %1 = tpu.assume_multiple %0, 8 : i32
    %c0 = arith.constant 0 : index
    %2 = arith.index_cast %1 : i32 to index
    %c0_0 = arith.constant 0 : index
    %3 = vector.load %arg2[%c0, %2, %c0_0] : memref<1x18x72xf32, #tpu.memory_space<vmem>>, vector<1x10x72xf32>
    %4 = vector.shape_cast %3 : vector<1x10x72xf32> to vector<10x72xf32>
    %cst = arith.constant 0.000000e+00 : f32
    %5 = vector.broadcast %cst : f32 to vector<8x128xf32>
    %6 = vector.extract_strided_slice %4 {offsets = [0, 0], sizes = [8, 72], strides = [1, 1]} : vector<10x72xf32> to vector<8x72xf32>
    %7 = arith.truncf %6 : vector<8x72xf32> to vector<8x72xbf16>
    %c0_1 = arith.constant 0 : index
    %c0_2 = arith.constant 0 : index
    %c0_3 = arith.constant 0 : index
    %8 = vector.load %arg3[%c0_1, %c0_2, %c0_3] : memref<3x72x128xbf16, #tpu.memory_space<vmem>>, vector<1x72x128xbf16>
    %9 = vector.shape_cast %8 : vector<1x72x128xbf16> to vector<72x128xbf16>
    %cst_4 = arith.constant dense<0.000000e+00> : vector<8x128xf32>
    %10 = tpu.matmul %7, %9, %cst_4 {dimension_numbers = #tpu.dot_dimension_numbers<[1], [0], [0], [1], [0, 0, 1, 1], [], []>} : vector<8x72xbf16>, vector<72x128xbf16>, vector<8x128xf32> -> vector<8x128xf32>
    %11 = arith.addf %5, %10 : vector<8x128xf32>
    %12 = vector.extract_strided_slice %4 {offsets = [1, 0], sizes = [8, 72], strides = [1, 1]} : vector<10x72xf32> to vector<8x72xf32>
    %13 = arith.truncf %12 : vector<8x72xf32> to vector<8x72xbf16>
    %c1 = arith.constant 1 : index
    %c0_5 = arith.constant 0 : index
    %c0_6 = arith.constant 0 : index
    %14 = vector.load %arg3[%c1, %c0_5, %c0_6] : memref<3x72x128xbf16, #tpu.memory_space<vmem>>, vector<1x72x128xbf16>
    %15 = vector.shape_cast %14 : vector<1x72x128xbf16> to vector<72x128xbf16>
    %cst_7 = arith.constant dense<0.000000e+00> : vector<8x128xf32>
    %16 = tpu.matmul %13, %15, %cst_7 {dimension_numbers = #tpu.dot_dimension_numbers<[1], [0], [0], [1], [0, 0, 1, 1], [], []>} : vector<8x72xbf16>, vector<72x128xbf16>, vector<8x128xf32> -> vector<8x128xf32>
    %17 = arith.addf %11, %16 : vector<8x128xf32>
    %18 = vector.extract_strided_slice %4 {offsets = [2, 0], sizes = [8, 72], strides = [1, 1]} : vector<10x72xf32> to vector<8x72xf32>
    %19 = arith.truncf %18 : vector<8x72xf32> to vector<8x72xbf16>
    %c2 = arith.constant 2 : index
    %c0_8 = arith.constant 0 : index
    %c0_9 = arith.constant 0 : index
    %20 = vector.load %arg3[%c2, %c0_8, %c0_9] : memref<3x72x128xbf16, #tpu.memory_space<vmem>>, vector<1x72x128xbf16>
    %21 = vector.shape_cast %20 : vector<1x72x128xbf16> to vector<72x128xbf16>
    %cst_10 = arith.constant dense<0.000000e+00> : vector<8x128xf32>
    %22 = tpu.matmul %19, %21, %cst_10 {dimension_numbers = #tpu.dot_dimension_numbers<[1], [0], [0], [1], [0, 0, 1, 1], [], []>} : vector<8x72xbf16>, vector<72x128xbf16>, vector<8x128xf32> -> vector<8x128xf32>
    %23 = arith.addf %17, %22 : vector<8x128xf32>
    %cst_11 = arith.constant dense<0.000000e+00> : vector<128xf32>
    %24 = vector.multi_reduction <add>, %23, %cst_11 [0] : vector<8x128xf32> to vector<128xf32>
    %25 = vector.shape_cast %24 : vector<128xf32> to vector<1x128xf32>
    %c0_12 = arith.constant 0 : index
    %c0_13 = arith.constant 0 : index
    %c0_14 = arith.constant 0 : index
    %c0_15 = arith.constant 0 : index
    %26 = vector.load %arg5[%c0_12, %c0_13, %c0_14, %c0_15] : memref<1x1x2x128xf32, #tpu.memory_space<vmem>>, vector<1x1x1x128xf32>
    %27 = vector.shape_cast %26 : vector<1x1x1x128xf32> to vector<1x128xf32>
    %28 = vector.shape_cast %25 : vector<1x128xf32> to vector<1x1x1x128xf32>
    tpu.vector_store %arg5[%c0_12, %c0_13, %c0_14, %c0_15], %28 {strides = array<i32>} : memref<1x1x2x128xf32, #tpu.memory_space<vmem>>, vector<1x1x1x128xf32>,
    %29 = arith.mulf %23, %23 : vector<8x128xf32>
    %cst_16 = arith.constant dense<0.000000e+00> : vector<128xf32>
    %30 = vector.multi_reduction <add>, %29, %cst_16 [0] : vector<8x128xf32> to vector<128xf32>
    %31 = vector.shape_cast %30 : vector<128xf32> to vector<1x128xf32>
    %c0_17 = arith.constant 0 : index
    %c0_18 = arith.constant 0 : index
    %c1_19 = arith.constant 1 : index
    %c0_20 = arith.constant 0 : index
    %32 = vector.load %arg5[%c0_17, %c0_18, %c1_19, %c0_20] : memref<1x1x2x128xf32, #tpu.memory_space<vmem>>, vector<1x1x1x128xf32>
    %33 = vector.shape_cast %32 : vector<1x1x1x128xf32> to vector<1x128xf32>
    %34 = vector.shape_cast %31 : vector<1x128xf32> to vector<1x1x1x128xf32>
    tpu.vector_store %arg5[%c0_17, %c0_18, %c1_19, %c0_20], %34 {strides = array<i32>} : memref<1x1x2x128xf32, #tpu.memory_space<vmem>>, vector<1x1x1x128xf32>,
    %c0_21 = arith.constant 0 : index
    %c0_22 = arith.constant 0 : index
    %c0_23 = arith.constant 0 : index
    %35 = vector.load %arg4[%c0_21, %c0_22, %c0_23] : memref<1x8x128xf32, #tpu.memory_space<vmem>>, vector<1x8x128xf32>
    %36 = vector.shape_cast %35 : vector<1x8x128xf32> to vector<8x128xf32>
    %37 = vector.shape_cast %23 : vector<8x128xf32> to vector<1x8x128xf32>
    tpu.vector_store %arg4[%c0_21, %c0_22, %c0_23], %37 {strides = array<i32>} : memref<1x8x128xf32, #tpu.memory_space<vmem>>, vector<1x8x128xf32>,
    return
  }
  func.func @transform_0(%arg0: i32, %arg1: i32) -> (i32, i32, i32) {
    %c0_i32 = arith.constant 0 : i32
    %c0_i32_0 = arith.constant 0 : i32
    %c0_i32_1 = arith.constant 0 : i32
    return %arg0, %c0_i32, %c0_i32_0 : i32, i32, i32
  }
  func.func @transform_1(%arg0: i32, %arg1: i32) -> (i32, i32, i32) {
    %c0_i32 = arith.constant 0 : i32
    %c0_i32_0 = arith.constant 0 : i32
    %c0_i32_1 = arith.constant 0 : i32
    %c0_i32_2 = arith.constant 0 : i32
    return %c0_i32, %c0_i32_0, %c0_i32_1 : i32, i32, i32
  }
  func.func @transform_2(%arg0: i32, %arg1: i32) -> (i32, i32, i32) {
    %c0_i32 = arith.constant 0 : i32
    %c0_i32_0 = arith.constant 0 : i32
    return %arg0, %arg1, %c0_i32 : i32, i32, i32
  }
  func.func @transform_3(%arg0: i32, %arg1: i32) -> (i32, i32, i32, i32) {
    %c0_i32 = arith.constant 0 : i32
    %c0_i32_0 = arith.constant 0 : i32
    %c0_i32_1 = arith.constant 0 : i32
    return %arg0, %arg1, %c0_i32, %c0_i32_0 : i32, i32, i32, i32
  }
}

</mosaic_0001>

<llo_original>
// kernel: tpu_custom_call.1
$region0: #{tpu_custom_call.1}
  #allocation0 [shape = 'u32[]', space=smem, size = 0x4, offset = 0x4, fixed_abs, tag = 'smem constant byte address 0x4 - core index']
  #allocation1 [shape = 'u32[144,128]{1,0:T(1,128)}', space=vmem, size = 0x12000, scoped, tag = 'internal scratch']
  %s0 = inlined_call_operand.vmem [shape: f32[2,18,72], index: 0, kind: input, shape index: {}]
  %s1 = inlined_call_operand.hbm [shape: bf16[3,72,128], index: 1, kind: input, shape index: {}]
  %s2 = inlined_call_operand.hbm [shape: f32[2,16,128], index: 2, kind: output, shape index: {0}]
  %s3 = inlined_call_operand.hbm [shape: f32[2,2,2,128], index: 3, kind: output, shape index: {1}]
  %4 = xla_tuple %s2, %s3
  %s5 = sld [smem:[#allocation0]]
  $region53: #{tpu_custom_call.1} parent=0
    _
  %s7 = ssub.s32 1, %s5
  %s8 = scalar_select 0, %s7, %s5
  $region1: #{tpu_custom_call.1} parent=0
    #allocation2 [shape = 'u8[55296]{0}', space=vmem, size = 0xd800, scoped, tag = 'input window, operand 1, single buffered']
    #allocation3 [shape = 's32[2]{0}', space=sflag, size = 0x8, scoped, tag = 'scoped memory for tpu_custom_call.1']
    #allocation4 [shape = 's32[2]{0}', space=sflag, size = 0x8, scoped, tag = 'scoped memory for tpu_custom_call.1']
    #allocation5 [shape = 'u8[8192]{0}', space=vmem, size = 0x2000, scoped, tag = 'output window, operand 0']
    #allocation6 [shape = 'u8[2048]{0}', space=vmem, size = 0x800, scoped, tag = 'output window, operand 1']
    #allocation7 [shape = 's32[2]{0}', space=sflag, size = 0x8, scoped, tag = 'scoped memory for tpu_custom_call.1']
    %9 = vsyncpa [#allocation3], 0
    %10 = vsyncpa [#allocation4], 0
    %s11 = scalar_lea.sflag [#allocation4], 1
    %12 = vsyncpa %s11, 0
    %13 = vsyncpa [#allocation7], 0
    %s14 = scalar_lea.sflag [#allocation7], 1
    %15 = vsyncpa %s14, 0
    loop: start=0, step=1, limit=6
    $region2: #{tpu_custom_call.1} parent=1 // loop_pre_header
      _
    $region3: #{tpu_custom_call.1} parent=1 // loop_header
      %s17 = sphi 0, %s21
      %p18 = scmp.ge.s32.totalorder %s17, 6
      %s24 = sphi 0, %s36
      %s25 = sphi 0, %s32
      %s26 = sphi 0, %s24
      %s27 = sphi 0, %s25
      %s28 = sphi 0, %s26
      %s29 = sphi 0, %s27
      %s39 = sphi 0, %s41
      %s42 = sphi 0, %s39
      %s43 = sphi 0, %s42
      %s59 = sphi 0, %s43
      %s63 = sphi 0, %s63
      %s65 = sphi 0, %s63
      %s66 = sphi 0, %s65
      %s80 = sphi 0, %s66
      %s88 = sphi 0, %s90
      %s91 = sphi 0, %s88
      %s92 = sphi 0, %s91
      %s108 = sphi 0, %s92
      %s116 = sphi 0, %s118
      %s119 = sphi 0, %s116
      %s120 = sphi 0, %s119
      %s136 = sphi 0, %s120
    $region4: #{tpu_custom_call.1} parent=1 // loop_header_branch
      %20 = sbr.rel (%p18) target = $region8
    $region5: #{tpu_custom_call.1} parent=1 // loop_body
      %s22 = ssub.s32 %s17, 1
      %s23 = ssub.s32 %s17, 2
      %s30 = sadd.s32 1, %s25
      %p31 = scmp.ge.s32.totalorder %s30, 2
      %s32 = scalar_select %p31, 0, %s30
      %s33 = sadd.s32 1, %s24
      %s34 = scalar_select %p31, %s33, %s24
      %p35 = scmp.ge.s32.totalorder %s34, 2
      %s36 = scalar_select %p35, 0, %s34
      %s37 = ssub.s32 %s24, %s36
      %p38 = scmp.eq.s32.totalorder %s37, 0
      %s40 = sadd.s32 %s39, 1
      %s41 = scalar_select %p38, %s39, %s40
      %p44 = pneg %p38
      %p45 = scmp.eq.s32.totalorder %s17, 3
      %p46 = por %p44, %p45
      %p47 = scmp.ne.s32.totalorder %s39, %s42
      %p48 = scmp.eq.s32.totalorder %s17, 0
      %p49 = por %p47, %p48
      %p50 = scmp.ne.s32.totalorder %s39, %s42
      %p51 = scmp.eq.s32.totalorder %s22, 3
      %p52 = por %p50, %p51
      %p53 = scmp.ne.s32.totalorder %s42, %s43
      %p54 = scmp.eq.s32.totalorder %s22, 0
      %p55 = por %p53, %p54
      %p56 = scmp.ne.s32.totalorder %s42, %s43
      %p57 = scmp.eq.s32.totalorder %s23, 3
      %p58 = por %p56, %p57
      %p60 = scmp.ne.s32.totalorder %s43, %s59
      %p61 = scmp.eq.s32.totalorder %s23, 0
      %p62 = por %p60, %p61
      %s64 = sadd.s32 %s63, 1
      %p67 = scmp.eq.s32.totalorder %s17, 3
      %p68 = scmp.ne.s32.totalorder %s63, %s65
      %p69 = scmp.eq.s32.totalorder %s17, 0
      %p70 = por %p68, %p69
      %p71 = scmp.ne.s32.totalorder %s63, %s65
      %p72 = scmp.eq.s32.totalorder %s22, 3
      %p73 = por %p71, %p72
      %p74 = scmp.ne.s32.totalorder %s65, %s66
      %p75 = scmp.eq.s32.totalorder %s22, 0
      %p76 = por %p74, %p75
      %p77 = scmp.ne.s32.totalorder %s65, %s66
      %p78 = scmp.eq.s32.totalorder %s23, 3
      %p79 = por %p77, %p78
      %p81 = scmp.ne.s32.totalorder %s66, %s80
      %p82 = scmp.eq.s32.totalorder %s23, 0
      %p83 = por %p81, %p82
      %s84 = ssub.s32 %s24, %s36
      %s85 = ssub.s32 %s25, %s32
      %s86 = sor.u32 %s84, %s85
      %p87 = scmp.eq.s32.totalorder %s86, 0
      %s89 = sadd.s32 %s88, 1
      %s90 = scalar_select %p87, %s88, %s89
      %p93 = pneg %p87
      %p94 = scmp.eq.s32.totalorder %s17, 3
      %p95 = por %p93, %p94
      %p96 = scmp.ne.s32.totalorder %s88, %s91
      %p97 = scmp.eq.s32.totalorder %s17, 0
      %p98 = por %p96, %p97
      %p99 = scmp.ne.s32.totalorder %s88, %s91
      %p100 = scmp.eq.s32.totalorder %s22, 3
      %p101 = por %p99, %p100
      %p102 = scmp.ne.s32.totalorder %s91, %s92
      %p103 = scmp.eq.s32.totalorder %s22, 0
      %p104 = por %p102, %p103
      %p105 = scmp.ne.s32.totalorder %s91, %s92
      %p106 = scmp.eq.s32.totalorder %s23, 3
      %p107 = por %p105, %p106
      %p109 = scmp.ne.s32.totalorder %s92, %s108
      %p110 = scmp.eq.s32.totalorder %s23, 0
      %p111 = por %p109, %p110
      %s112 = ssub.s32 %s24, %s36
      %s113 = ssub.s32 %s25, %s32
      %s114 = sor.u32 %s112, %s113
      %p115 = scmp.eq.s32.totalorder %s114, 0
      %s117 = sadd.s32 %s116, 1
      %s118 = scalar_select %p115, %s116, %s117
      %p121 = pneg %p115
      %p122 = scmp.eq.s32.totalorder %s17, 3
      %p123 = por %p121, %p122
      %p124 = scmp.ne.s32.totalorder %s116, %s119
      %p125 = scmp.eq.s32.totalorder %s17, 0
      %p126 = por %p124, %p125
      %p127 = scmp.ne.s32.totalorder %s116, %s119
      %p128 = scmp.eq.s32.totalorder %s22, 3
      %p129 = por %p127, %p128
      %p130 = scmp.ne.s32.totalorder %s119, %s120
      %p131 = scmp.eq.s32.totalorder %s22, 0
      %p132 = por %p130, %p131
      %p133 = scmp.ne.s32.totalorder %s119, %s120
      %p134 = scmp.eq.s32.totalorder %s23, 3
      %p135 = por %p133, %p134
      %p137 = scmp.ne.s32.totalorder %s120, %s136
      %p138 = scmp.eq.s32.totalorder %s23, 0
      %p139 = por %p137, %p138
      %p140 = scmp.le.s32.totalorder 1, %s17
      %p141 = scmp.lt.s32.totalorder %s17, 5
      %p142 = pnand %p140, %p141
      %p143 = pneg %p142
      // Predicated region
      $region9: #{tpu_custom_call.1} parent=5 // pred_check
        _
      $region10: #{tpu_custom_call.1} parent=5 // pred_check_branch
        %145 = sbr.rel (%p142) target = $region12
      $region11: #{tpu_custom_call.1} parent=5 // pred_region
        %s146 = ssub.s32 %s17, 1
        // Predicated region
        $region13: #{tpu_custom_call.1} parent=11 // pred_check
          %p147 = pneg %p76
        $region14: #{tpu_custom_call.1} parent=11 // pred_check_branch
          %149 = sbr.rel (%p147) target = $region16
        $region15: #{tpu_custom_call.1} parent=11 // pred_region
          %s151 = ssub.s32 1728, 1728
          %152 = vsyncadd [#allocation3], %s151
          %s153 = sshll.u32 [#allocation2], 4
          %s154 = int_to_ptr.vmem [resolvable:$true] %s153
          %159 = dma.hbm_to_vmem [thread:$0]  %s1, 1728, %s154, [#allocation3], 64, 64, 4
        $region16: #{tpu_custom_call.1} parent=11 // pred_fallthru
          _
      $region12: #{tpu_custom_call.1} parent=5 // pred_fallthru
        _
      %p160 = scmp.lt.s32.totalorder %s17, 4
      // Predicated region
      $region17: #{tpu_custom_call.1} parent=5 // pred_check
        %p161 = pneg %p160
      $region18: #{tpu_custom_call.1} parent=5 // pred_check_branch
        %163 = sbr.rel (%p161) target = $region20
      $region19: #{tpu_custom_call.1} parent=5 // pred_region
        // Predicated region
        $region21: #{tpu_custom_call.1} parent=19 // pred_check
          %p164 = pneg %p49
        $region22: #{tpu_custom_call.1} parent=19 // pred_check_branch
          %166 = sbr.rel (%p164) target = $region24
        $region23: #{tpu_custom_call.1} parent=19 // pred_region
          %p167 = scmp.lt.s32.totalorder %s24, 1
          %s168 = scalar_select %p167, %s24, 1
          %s169 = smul.addr %s168, 3
          %s170 = smul.addr %s169, 8
          %s171 = scalar_lea.vmem %s0, %s170
        $region24: #{tpu_custom_call.1} parent=19 // pred_fallthru
          _
      $region20: #{tpu_custom_call.1} parent=5 // pred_fallthru
        _
      %p172 = scmp.le.s32.totalorder 1, %s17
      %p173 = scmp.lt.s32.totalorder %s17, 5
      %p174 = pnand %p172, %p173
      %p175 = pneg %p174
      // Predicated region
      $region25: #{tpu_custom_call.1} parent=5 // pred_check
        _
      $region26: #{tpu_custom_call.1} parent=5 // pred_check_branch
        %177 = sbr.rel (%p174) target = $region28
      $region27: #{tpu_custom_call.1} parent=5 // pred_region
        %s178 = ssub.s32 %s17, 1
        // Predicated region
        $region29: #{tpu_custom_call.1} parent=27 // pred_check
          %p179 = pneg %p76
        $region30: #{tpu_custom_call.1} parent=27 // pred_check_branch
          %181 = sbr.rel (%p179) target = $region32
        $region31: #{tpu_custom_call.1} parent=27 // pred_region
          %182 = dma.done [#allocation3], 1728
        $region32: #{tpu_custom_call.1} parent=27 // pred_fallthru
          _
        %p183 = scmp.lt.s32.totalorder %s26, 1
        %s184 = scalar_select %p183, %s26, 1
        %s185 = smul.addr %s184, 3
        %s186 = smul.addr %s185, 8
        %s187 = scalar_lea.vmem %s0, %s186
        %p188 = pneg %p55
        %p189 = pneg %p52
        %p190 = pneg %p76
        %p191 = pneg %p73
        %p192 = pneg %p104
        %p193 = pneg %p101
        %s194 = sand.u32 %s91, 1
        %s195 = scalar_lea.sflag [#allocation4], %s194
        %s196 = sand.u32 %s91, 1
        %s197 = smul.addr %s196, 8
        %s198 = scalar_lea.vmem [#allocation5], %s197
        %p199 = pneg %p132
        %p200 = pneg %p129
        %s201 = sand.u32 %s119, 1
        %s202 = scalar_lea.sflag [#allocation7], %s201
        %s203 = sand.u32 %s119, 1
        %s204 = smul.addr %s203, 2
        %s205 = scalar_lea.vmem [#allocation6], %s204
        %p206 = scmp.lt.s32.totalorder %s26, 1
        %s207 = scalar_select %p206, %s26, 1
        %s208 = smul.addr %s207, 3
        %s209 = smul.addr %s208, 8
        %s210 = scalar_lea.vmem %s0, %s209
        %s212 = smul.u32 %s27, 8
        %s213 = scalar_lea.vmem %s210, %s212
        %v214 = vld [vmem:[%s213] sm:$0xff]
        %v215 = vld [vmem:[%s213 + $0x8] sm:$0x3]
        %v216 = vpack.c.bf16 %v214, %v214
        %v217 = vld [vmem:[#allocation2] sm:$0xf]
        %v218 = vld [vmem:[#allocation2 + $0x4] sm:$0xf]
        %v219 = vld [vmem:[#allocation2 + $0x8] sm:$0xf]
        %v220 = vld [vmem:[#allocation2 + $0xc] sm:$0xf]
        %v221 = vld [vmem:[#allocation2 + $0x10] sm:$0xf]
        %v222 = vld [vmem:[#allocation2 + $0x14] sm:$0xf]
        %v223 = vld [vmem:[#allocation2 + $0x18] sm:$0xf]
        %v224 = vld [vmem:[#allocation2 + $0x1c] sm:$0xf]
        %v225 = vld [vmem:[#allocation2 + $0x20] sm:$0xf]
        %v226 = vpack.c.bf16 %v215, %v214
        %s227 = scalar_lea.vmem [#allocation2], 36
        %v228 = vld [vmem:[%s227] sm:$0xf]
        %v229 = vld [vmem:[%s227 + $0x4] sm:$0xf]
        %v230 = vld [vmem:[%s227 + $0x8] sm:$0xf]
        %v231 = vld [vmem:[%s227 + $0xc] sm:$0xf]
        %v232 = vld [vmem:[%s227 + $0x10] sm:$0xf]
        %v233 = vld [vmem:[%s227 + $0x14] sm:$0xf]
        %v234 = vld [vmem:[%s227 + $0x18] sm:$0xf]
        %v235 = vld [vmem:[%s227 + $0x1c] sm:$0xf]
        %v236 = vld [vmem:[%s227 + $0x20] sm:$0xf]
        %v238 = vshrl.u32 %v226, 16
        %v240 = vshll.u32 %v226, 16
        %v242 = vrot.slane %v240, 1
        %v243 = vor.u32 %v238, %v242
        %v253 = vunpack.c.l.b16 %v228
        %v254 = vunpack.c.l.b16 %v229
        %v255 = vunpack.c.l.b16 %v230
        %v256 = vunpack.c.l.b16 %v231
        %v257 = vunpack.c.l.b16 %v232
        %v258 = vunpack.c.l.b16 %v233
        %v259 = vunpack.c.l.b16 %v234
        %v260 = vunpack.c.l.b16 %v235
        %v261 = vunpack.c.l.b16 %v236
        %v262 = vpack.c.b16 %v254, %v253
        %v263 = vpack.c.b16 %v256, %v255
        %v264 = vpack.c.b16 %v258, %v257
        %v265 = vpack.c.b16 %v260, %v259
        %v266 = vpack.c.b16 %v261, %v261
        %vm271 = vcmask 588800
        %v273 = vsel %vm271, %v243, 0
        %vm275 = vcmask 1043456
        %v277 = vsel %vm275, %v266, 0
        %279 = vmatprep.subr.bf16.mxu0 0
        %280 = vmatpush1.bf16.msra.mxu0 %v262
        %281 = vmatprep.subr.bf16.mxu0 0
        %282 = vmatpush1.bf16.msra.mxu0 %v263
        %283 = vmatprep.subr.bf16.mxu0 0
        %284 = vmatpush1.bf16.msra.mxu0 %v264
        %285 = vmatprep.subr.bf16.mxu0 0
        %286 = vmatpush1.bf16.msra.mxu0 %v265
        %287 = vmatprep.subr.bf16.mxu0 0
        %288 = vmatpush1.bf16.msra.mxu0 %v277
        %289 = vmatprep.subr.bf16.mxu0 0
        %290 = vmatpush1.bf16.msra.mxu0 0
        %291 = vmatprep.subr.bf16.mxu0 0
        %292 = vmatpush1.bf16.msra.mxu0 0
        %293 = vmatprep.subr.bf16.mxu0 0
        %294 = vmatpush1.bf16.msra.mxu0 0
        %295 = vmatprep.subr.bf16.mxu0 0
        %296 = vmatpush1.bf16.msra.mxu0 0
        %297 = vmatprep.subr.bf16.mxu0 0
        %298 = vmatpush1.bf16.msra.mxu0 0
        %299 = vmatprep.subr.bf16.mxu0 0
        %300 = vmatpush1.bf16.msra.mxu0 0
        %301 = vmatprep.subr.bf16.mxu0 0
        %302 = vmatpush1.bf16.msra.mxu0 0
        %303 = vmatprep.subr.bf16.mxu0 0
        %304 = vmatpush1.bf16.msra.mxu0 0
        %305 = vmatprep.subr.bf16.mxu0 0
        %306 = vmatpush1.bf16.msra.mxu0 0
        %307 = vmatprep.subr.bf16.mxu0 0
        %308 = vmatpush1.bf16.msra.mxu0 0
        %309 = vmatprep.subr.bf16.mxu0 0
        %310 = vmatpush1.bf16.msra.mxu0 0
        %311 = vmatprep.mubr.bf16.mxu0 0
        %312 = vmatmul.mubr.bf16.gmra.mrb[0].mxu0 %v273
        %v313 = vpop.f32.mrb[0].mxu0
        %v314 = vadd.f32 0.0, %v313
        %v315 = vpop.f32.mrb[0].mxu0
        %v316 = vpop.f32.mrb[0].mxu0
        %v317 = vpop.f32.mrb[0].mxu0
        %318 = vdwg.mxu0
        %v328 = vunpack.c.l.b16 %v217
        %v329 = vunpack.c.l.b16 %v218
        %v330 = vunpack.c.l.b16 %v219
        %v331 = vunpack.c.l.b16 %v220
        %v332 = vunpack.c.l.b16 %v221
        %v333 = vunpack.c.l.b16 %v222
        %v334 = vunpack.c.l.b16 %v223
        %v335 = vunpack.c.l.b16 %v224
        %v336 = vunpack.c.l.b16 %v225
        %v337 = vpack.c.b16 %v329, %v328
        %v338 = vpack.c.b16 %v331, %v330
        %v339 = vpack.c.b16 %v333, %v332
        %v340 = vpack.c.b16 %v335, %v334
        %v341 = vpack.c.b16 %v336, %v336
        %v347 = vsel %vm271, %v216, 0
        %v350 = vsel %vm275, %v341, 0
        %352 = vmatprep.subr.bf16.mxu0 0
        %353 = vmatpush1.bf16.msra.mxu0 %v337
        %354 = vmatprep.subr.bf16.mxu0 0
        %355 = vmatpush1.bf16.msra.mxu0 %v338
        %356 = vmatprep.subr.bf16.mxu0 0
        %357 = vmatpush1.bf16.msra.mxu0 %v339
        %358 = vmatprep.subr.bf16.mxu0 0
        %359 = vmatpush1.bf16.msra.mxu0 %v340
        %360 = vmatprep.subr.bf16.mxu0 0
        %361 = vmatpush1.bf16.msra.mxu0 %v350
        %362 = vmatprep.subr.bf16.mxu0 0
        %363 = vmatpush1.bf16.msra.mxu0 0
        %364 = vmatprep.subr.bf16.mxu0 0
        %365 = vmatpush1.bf16.msra.mxu0 0
        %366 = vmatprep.subr.bf16.mxu0 0
        %367 = vmatpush1.bf16.msra.mxu0 0
        %368 = vmatprep.subr.bf16.mxu0 0
        %369 = vmatpush1.bf16.msra.mxu0 0
        %370 = vmatprep.subr.bf16.mxu0 0
        %371 = vmatpush1.bf16.msra.mxu0 0
        %372 = vmatprep.subr.bf16.mxu0 0
        %373 = vmatpush1.bf16.msra.mxu0 0
        %374 = vmatprep.subr.bf16.mxu0 0
        %375 = vmatpush1.bf16.msra.mxu0 0
        %376 = vmatprep.subr.bf16.mxu0 0
        %377 = vmatpush1.bf16.msra.mxu0 0
        %378 = vmatprep.subr.bf16.mxu0 0
        %379 = vmatpush1.bf16.msra.mxu0 0
        %380 = vmatprep.subr.bf16.mxu0 0
        %381 = vmatpush1.bf16.msra.mxu0 0
        %382 = vmatprep.subr.bf16.mxu0 0
        %383 = vmatpush1.bf16.msra.mxu0 0
        %384 = vmatprep.mubr.bf16.mxu0 0
        %385 = vmatmul.mubr.bf16.gmra.mrb[0].mxu0 %v347
        %v386 = vpop.f32.mrb[0].mxu0
        %v387 = vadd.f32 %v314, %v386
        %v388 = vpop.f32.mrb[0].mxu0
        %v389 = vpop.f32.mrb[0].mxu0
        %v390 = vpop.f32.mrb[0].mxu0
        %391 = vdwg.mxu0
        %s392 = scalar_lea.vmem [#allocation2], 72
        %v393 = vld [vmem:[%s392] sm:$0xf]
        %v394 = vld [vmem:[%s392 + $0x4] sm:$0xf]
        %v395 = vld [vmem:[%s392 + $0x8] sm:$0xf]
        %v396 = vld [vmem:[%s392 + $0xc] sm:$0xf]
        %v397 = vld [vmem:[%s392 + $0x10] sm:$0xf]
        %v398 = vld [vmem:[%s392 + $0x14] sm:$0xf]
        %v399 = vld [vmem:[%s392 + $0x18] sm:$0xf]
        %v400 = vld [vmem:[%s392 + $0x1c] sm:$0xf]
        %v401 = vld [vmem:[%s392 + $0x20] sm:$0xf]
        %v403 = vrot.slane %v226, 1
        %v413 = vunpack.c.l.b16 %v393
        %v414 = vunpack.c.l.b16 %v394
        %v415 = vunpack.c.l.b16 %v395
        %v416 = vunpack.c.l.b16 %v396
        %v417 = vunpack.c.l.b16 %v397
        %v418 = vunpack.c.l.b16 %v398
        %v419 = vunpack.c.l.b16 %v399
        %v420 = vunpack.c.l.b16 %v400
        %v421 = vunpack.c.l.b16 %v401
        %v422 = vpack.c.b16 %v414, %v413
        %v423 = vpack.c.b16 %v416, %v415
        %v424 = vpack.c.b16 %v418, %v417
        %v425 = vpack.c.b16 %v420, %v419
        %v426 = vpack.c.b16 %v421, %v421
        %v432 = vsel %vm271, %v403, 0
        %v435 = vsel %vm275, %v426, 0
        %437 = vmatprep.subr.bf16.mxu0 0
        %438 = vmatpush1.bf16.msra.mxu0 %v422
        %439 = vmatprep.subr.bf16.mxu0 0
        %440 = vmatpush1.bf16.msra.mxu0 %v423
        %441 = vmatprep.subr.bf16.mxu0 0
        %442 = vmatpush1.bf16.msra.mxu0 %v424
        %443 = vmatprep.subr.bf16.mxu0 0
        %444 = vmatpush1.bf16.msra.mxu0 %v425
        %445 = vmatprep.subr.bf16.mxu0 0
        %446 = vmatpush1.bf16.msra.mxu0 %v435
        %447 = vmatprep.subr.bf16.mxu0 0
        %448 = vmatpush1.bf16.msra.mxu0 0
        %449 = vmatprep.subr.bf16.mxu0 0
        %450 = vmatpush1.bf16.msra.mxu0 0
        %451 = vmatprep.subr.bf16.mxu0 0
        %452 = vmatpush1.bf16.msra.mxu0 0
        %453 = vmatprep.subr.bf16.mxu0 0
        %454 = vmatpush1.bf16.msra.mxu0 0
        %455 = vmatprep.subr.bf16.mxu0 0
        %456 = vmatpush1.bf16.msra.mxu0 0
        %457 = vmatprep.subr.bf16.mxu0 0
        %458 = vmatpush1.bf16.msra.mxu0 0
        %459 = vmatprep.subr.bf16.mxu0 0
        %460 = vmatpush1.bf16.msra.mxu0 0
        %461 = vmatprep.subr.bf16.mxu0 0
        %462 = vmatpush1.bf16.msra.mxu0 0
        %463 = vmatprep.subr.bf16.mxu0 0
        %464 = vmatpush1.bf16.msra.mxu0 0
        %465 = vmatprep.subr.bf16.mxu0 0
        %466 = vmatpush1.bf16.msra.mxu0 0
        %467 = vmatprep.subr.bf16.mxu0 0
        %468 = vmatpush1.bf16.msra.mxu0 0
        %469 = vmatprep.mubr.bf16.mxu0 0
        %470 = vmatmul.mubr.bf16.gmra.mrb[0].mxu0 %v432
        %v471 = vpop.f32.mrb[0].mxu0
        %v472 = vadd.f32 0.0, %v471
        %v473 = vpop.f32.mrb[0].mxu0
        %v474 = vpop.f32.mrb[0].mxu0
        %v475 = vpop.f32.mrb[0].mxu0
        %476 = vdwg.mxu0
        %v477 = vadd.f32 %v387, %v472
        %v478 = vrot.slane %v477, 4
        %v479 = vadd.f32 %v477, %v478
        %v480 = vrot.slane %v479, 2
        %v481 = vadd.f32 %v479, %v480
        %v482 = vrot.slane %v481, 1
        %v483 = vadd.f32 %v481, %v482
        %484 = vst [vmem:[%s205] sm:$0x1] %v483
        %v485 = vmul.f32 %v477, %v477
        %v486 = vrot.slane %v485, 4
        %v487 = vadd.f32 %v485, %v486
        %v488 = vrot.slane %v487, 2
        %v489 = vadd.f32 %v487, %v488
        %v490 = vrot.slane %v489, 1
        %v491 = vadd.f32 %v489, %v490
        %492 = vst [vmem:[%s205 + $0x1] sm:$0x1] %v491
        %493 = vst [vmem:[%s198] sm:$0xff] %v477
        %s494 = sand.u32 %s91, 1
        %s495 = scalar_lea.sflag [#allocation4], %s494
        %s496 = sand.u32 %s91, 1
        %s497 = smul.addr %s496, 8
        %s498 = scalar_lea.vmem [#allocation5], %s497
        %s499 = sand.u32 %s119, 1
        %s500 = scalar_lea.sflag [#allocation7], %s499
        %s501 = sand.u32 %s119, 1
        %s502 = smul.addr %s501, 2
        %s503 = scalar_lea.vmem [#allocation6], %s502
        // Predicated region
        $region33: #{tpu_custom_call.1} parent=27 // pred_check
          %p504 = pneg %p101
        $region34: #{tpu_custom_call.1} parent=27 // pred_check_branch
          %506 = sbr.rel (%p504) target = $region36
        $region35: #{tpu_custom_call.1} parent=27 // pred_region
          %s508 = ssub.s32 128, 128
          %509 = vsyncadd %s495, %s508
          %s510 = smul.addr %s26, 2
          %s511 = sadd.s32 %s27, %s510
          %s512 = smul.addr %s511, 128
          %s513 = scalar_lea.hbm %s2, %s512
          %s515 = sshll.u32 %s498, 4
          %s516 = int_to_ptr.vmem [resolvable:$true] %s515
          %518 = dma.vmem_to_hbm [thread:$0]  %s516, 128, %s513, %s495
        $region36: #{tpu_custom_call.1} parent=27 // pred_fallthru
          _
        // Predicated region
        $region37: #{tpu_custom_call.1} parent=27 // pred_check
          %p519 = pneg %p129
        $region38: #{tpu_custom_call.1} parent=27 // pred_check_branch
          %521 = sbr.rel (%p519) target = $region40
        $region39: #{tpu_custom_call.1} parent=27 // pred_region
          %s523 = ssub.s32 32, 32
          %524 = vsyncadd %s500, %s523
          %s525 = smul.addr %s26, 2
          %s526 = sadd.s32 %s27, %s525
          %s527 = smul.addr %s526, 32
          %s528 = scalar_lea.hbm %s3, %s527
          %s530 = sshll.u32 %s503, 4
          %s531 = int_to_ptr.vmem [resolvable:$true] %s530
          %533 = dma.vmem_to_hbm [thread:$0]  %s531, 32, %s528, %s500
        $region40: #{tpu_custom_call.1} parent=27 // pred_fallthru
          _
      $region28: #{tpu_custom_call.1} parent=5 // pred_fallthru
        _
      %p534 = scmp.le.s32.totalorder 2, %s17
      // Predicated region
      $region41: #{tpu_custom_call.1} parent=5 // pred_check
        %p535 = pneg %p534
      $region42: #{tpu_custom_call.1} parent=5 // pred_check_branch
        %537 = sbr.rel (%p535) target = $region44
      $region43: #{tpu_custom_call.1} parent=5 // pred_region
        %s538 = ssub.s32 %s17, 2
        // Predicated region
        $region45: #{tpu_custom_call.1} parent=43 // pred_check
          %p539 = pneg %p107
        $region46: #{tpu_custom_call.1} parent=43 // pred_check_branch
          %541 = sbr.rel (%p539) target = $region48
        $region47: #{tpu_custom_call.1} parent=43 // pred_region
          %s542 = sand.u32 %s92, 1
          %s543 = scalar_lea.sflag [#allocation4], %s542
          %s544 = sand.u32 %s92, 1
          %s545 = smul.addr %s544, 8
          %s546 = scalar_lea.vmem [#allocation5], %s545
          %547 = dma.done %s543, 128
        $region48: #{tpu_custom_call.1} parent=43 // pred_fallthru
          _
        // Predicated region
        $region49: #{tpu_custom_call.1} parent=43 // pred_check
          %p548 = pneg %p135
        $region50: #{tpu_custom_call.1} parent=43 // pred_check_branch
          %550 = sbr.rel (%p548) target = $region52
        $region51: #{tpu_custom_call.1} parent=43 // pred_region
          %s551 = sand.u32 %s120, 1
          %s552 = scalar_lea.sflag [#allocation7], %s551
          %s553 = sand.u32 %s120, 1
          %s554 = smul.addr %s553, 2
          %s555 = scalar_lea.vmem [#allocation6], %s554
          %556 = dma.done %s552, 32
        $region52: #{tpu_custom_call.1} parent=43 // pred_fallthru
          _
      $region44: #{tpu_custom_call.1} parent=5 // pred_fallthru
        _
    $region6: #{tpu_custom_call.1} parent=1 // loop_footer
      %s21 = sadd.s32 1, %s17
    $region7: #{tpu_custom_call.1} parent=1 // loop_footer_branch
      %16 = sbr.rel target = $region3
    $region8: #{tpu_custom_call.1} parent=1 // loop_exit
      _
    %557 = vsyncpa [#allocation3], 1
    %s558 = scalar_lea.sflag [#allocation3], 1
    %559 = vsyncpa %s558, 1
    %560 = vsyncpa [#allocation4], 1
    %s561 = scalar_lea.sflag [#allocation4], 1
    %562 = vsyncpa %s561, 1
    %563 = vsyncpa [#allocation7], 1
    %s564 = scalar_lea.sflag [#allocation7], 1
    %565 = vsyncpa %s564, 1

</llo_original>
